<compile_context>
chip_gen: v5e
topology: v5e:2x2
jax: 0.10.0
libtpu: 0.0.40
codegen_flags: <defaults>
</compile_context>

<pallas_src>
import jax
import jax.numpy as jnp
from jax.experimental import pallas as pl
from jax.experimental.pallas import tpu as pltpu

BN_EPS = 1e-5


def decoder_layer_kernel(x_ref, w_ref, gamma_ref, beta_ref, o_ref):
    # x: (N, C_in), w: (C_in, TC) pre-transposed, gamma/beta: (1, TC)
    x = x_ref[...]
    w = w_ref[...]

    # Linear (bias omitted — it cancels under the BN mean subtraction below).
    y = jnp.dot(x, w, preferred_element_type=jnp.float32)        # (N, TC)

    # BatchNorm1d, training mode: biased batch statistics, single pass over y.
    inv_n = 1.0 / y.shape[0]
    s1 = jnp.sum(y, axis=0, keepdims=True)                       # (1, TC)
    s2 = jnp.sum(y * y, axis=0, keepdims=True)                   # (1, TC)
    mean = s1 * inv_n
    var = jnp.maximum(s2 * inv_n - mean * mean, 0.0)

    # Fold affine: out = y * scale + shift, then ReLU.
    scale = gamma_ref[...] * jax.lax.rsqrt(var + BN_EPS)         # (1, TC)
    shift = beta_ref[...] - mean * scale                         # (1, TC)
    out = y * scale + shift
    o_ref[...] = jnp.maximum(out, 0.0).astype(o_ref.dtype)


def decoder_layer(x, w, b, gamma, beta, *, tile_cout=128):
    """x: (N, C_in) f32, w: (C_out, C_in) f32 (nn.Linear layout) -> (N, C_out) f32."""
    del b  # Linear bias is mathematically a no-op under train-mode BatchNorm.

    n, c_in = x.shape
    c_out = w.shape[0]

    # Pre-transpose in the wrapper (free XLA layout choice) so the kernel does x @ w.
    w_t = w.T                                                    # (C_in, C_out)

    # Pad the channel axis to a lane-dense multiple of 128 so output stores are
    # unmasked vst; padded channels produce exact zeros (w=0, gamma=1, beta=0).
    c_out_p = pl.cdiv(c_out, tile_cout) * tile_cout
    pad = c_out_p - c_out
    if pad:
        w_t = jnp.pad(w_t, ((0, 0), (0, pad)))
        gamma = jnp.pad(gamma, (0, pad), constant_values=1.0)
        beta = jnp.pad(beta, (0, pad))
    g2 = gamma.reshape(1, c_out_p)
    be2 = beta.reshape(1, c_out_p)

    grid = (c_out_p // tile_cout,)

    out_padded = pl.pallas_call(
        decoder_layer_kernel,
        out_shape=jax.ShapeDtypeStruct((n, c_out_p), jnp.float32),
        grid=grid,
        in_specs=[
            pl.BlockSpec((n, c_in), lambda j: (0, 0)),           # x (full, resident)
            pl.BlockSpec((c_in, tile_cout), lambda j: (0, j)),   # w^T channel slab
            pl.BlockSpec((1, tile_cout), lambda j: (0, j)),      # gamma slab
            pl.BlockSpec((1, tile_cout), lambda j: (0, j)),      # beta slab
        ],
        out_specs=pl.BlockSpec((n, tile_cout), lambda j: (0, j)),
        compiler_params=pltpu.CompilerParams(
            dimension_semantics=("parallel",)),
    )(x, w_t, g2, be2)

    return out_padded[:, :c_out]


def reference(x, w, b, gamma, beta):
    # Faithful PyTorch forward: Linear(+bias) -> BatchNorm1d(train) -> ReLU.
    y = x @ w.T + b
    mean = jnp.mean(y, axis=0, keepdims=True)
    var = jnp.mean((y - mean) ** 2, axis=0, keepdims=True)
    y_hat = (y - mean) / jnp.sqrt(var + BN_EPS)
    return jnp.maximum(y_hat * gamma + beta, 0.0)


if __name__ == "__main__":
    key = jax.random.PRNGKey(0)
    k_x, k_w, k_b = jax.random.split(key, 3)

    batch, in_channels, out_channels = 8, 32, 16

    x = jax.random.normal(k_x, (batch, in_channels), dtype=jnp.float32)

    # Deterministic parameter init (nn.Linear-style uniform bound 1/sqrt(fan_in)).
    bound = 1.0 / (in_channels ** 0.5)
    w = jax.random.uniform(k_w, (out_channels, in_channels),
                           minval=-bound, maxval=bound, dtype=jnp.float32)
    b = jax.random.uniform(k_b, (out_channels,),
                           minval=-bound, maxval=bound, dtype=jnp.float32)
    # BatchNorm1d affine params at their PyTorch defaults.
    gamma = jnp.ones((out_channels,), dtype=jnp.float32)
    beta = jnp.zeros((out_channels,), dtype=jnp.float32)

    out = decoder_layer(x, w, b, gamma, beta)
    out = jax.block_until_ready(out)

    ref = reference(x, w, b, gamma, beta)
    assert out.shape == (batch, out_channels)
    assert jnp.allclose(out, ref, atol=1e-4, rtol=1e-4)

    print("KERNEL_OK")
</pallas_src>

<mosaic_0001>
module attributes {stable_mosaic.version = 11 : i64} {
  func.func @decoder_layer_kernel(%arg0: i32, %arg1: memref<8x32xf32, #tpu.memory_space<vmem>>, %arg2: memref<32x128xf32, #tpu.memory_space<vmem>>, %arg3: memref<1x128xf32, #tpu.memory_space<vmem>>, %arg4: memref<1x128xf32, #tpu.memory_space<vmem>>, %arg5: memref<8x128xf32, #tpu.memory_space<vmem>>) attributes {dimension_semantics = [#tpu.dimension_semantics<parallel>], iteration_bounds = array<i64: 1>, scalar_prefetch = 0 : i64, scratch_operands = 0 : i64, tpu.core_type = #tpu.core_type<tc>, window_params = [{pipeline_mode = #tpu.pipeline_mode<synchronous>, transform_indices = @transform_0, window_bounds = array<i64: 8, 32>}, {transform_indices = @transform_1, window_bounds = array<i64: 32, 128>}, {transform_indices = @transform_2, window_bounds = array<i64: 1, 128>}, {transform_indices = @transform_3, window_bounds = array<i64: 1, 128>}, {transform_indices = @transform_4, window_bounds = array<i64: 8, 128>}]} {
    %c0 = arith.constant 0 : index
    %c0_0 = arith.constant 0 : index
    %0 = vector.load %arg1[%c0, %c0_0] : memref<8x32xf32, #tpu.memory_space<vmem>>, vector<8x32xf32>
    %c0_1 = arith.constant 0 : index
    %c0_2 = arith.constant 0 : index
    %1 = vector.load %arg2[%c0_1, %c0_2] : memref<32x128xf32, #tpu.memory_space<vmem>>, vector<32x128xf32>
    %cst = arith.constant dense<0.000000e+00> : vector<8x128xf32>
    %2 = tpu.matmul %0, %1, %cst {dimension_numbers = #tpu.dot_dimension_numbers<[1], [0], [0], [1], [0, 0, 1, 1], [], []>} : vector<8x32xf32>, vector<32x128xf32>, vector<8x128xf32> -> vector<8x128xf32>
    %cst_3 = arith.constant dense<0.000000e+00> : vector<128xf32>
    %3 = vector.multi_reduction <add>, %2, %cst_3 [0] : vector<8x128xf32> to vector<128xf32>
    %4 = vector.shape_cast %3 : vector<128xf32> to vector<1x128xf32>
    %5 = arith.mulf %2, %2 : vector<8x128xf32>
    %cst_4 = arith.constant dense<0.000000e+00> : vector<128xf32>
    %6 = vector.multi_reduction <add>, %5, %cst_4 [0] : vector<8x128xf32> to vector<128xf32>
    %7 = vector.shape_cast %6 : vector<128xf32> to vector<1x128xf32>
    %cst_5 = arith.constant 1.250000e-01 : f32
    %8 = vector.broadcast %cst_5 : f32 to vector<1x128xf32>
    %9 = arith.mulf %4, %8 : vector<1x128xf32>
    %cst_6 = arith.constant 1.250000e-01 : f32
    %10 = vector.broadcast %cst_6 : f32 to vector<1x128xf32>
    %11 = arith.mulf %7, %10 : vector<1x128xf32>
    %12 = arith.mulf %9, %9 : vector<1x128xf32>
    %13 = arith.subf %11, %12 : vector<1x128xf32>
    %cst_7 = arith.constant 0.000000e+00 : f32
    %14 = vector.broadcast %cst_7 : f32 to vector<1x128xf32>
    %15 = arith.maximumf %13, %14 : vector<1x128xf32>
    %c0_8 = arith.constant 0 : index
    %c0_9 = arith.constant 0 : index
    %16 = vector.load %arg3[%c0_8, %c0_9] : memref<1x128xf32, #tpu.memory_space<vmem>>, vector<1x128xf32>
    %cst_10 = arith.constant 9.99999974E-6 : f32
    %17 = vector.broadcast %cst_10 : f32 to vector<1x128xf32>
    %18 = arith.addf %15, %17 : vector<1x128xf32>
    %19 = math.rsqrt %18 : vector<1x128xf32>
    %20 = arith.mulf %16, %19 : vector<1x128xf32>
    %c0_11 = arith.constant 0 : index
    %c0_12 = arith.constant 0 : index
    %21 = vector.load %arg4[%c0_11, %c0_12] : memref<1x128xf32, #tpu.memory_space<vmem>>, vector<1x128xf32>
    %22 = arith.mulf %9, %20 : vector<1x128xf32>
    %23 = arith.subf %21, %22 : vector<1x128xf32>
    %24 = vector.broadcast %20 : vector<1x128xf32> to vector<8x128xf32>
    %25 = arith.mulf %2, %24 : vector<8x128xf32>
    %26 = vector.broadcast %23 : vector<1x128xf32> to vector<8x128xf32>
    %27 = arith.addf %25, %26 : vector<8x128xf32>
    %cst_13 = arith.constant 0.000000e+00 : f32
    %28 = vector.broadcast %cst_13 : f32 to vector<8x128xf32>
    %29 = arith.maximumf %27, %28 : vector<8x128xf32>
    %c0_14 = arith.constant 0 : index
    %c0_15 = arith.constant 0 : index
    %30 = vector.load %arg5[%c0_14, %c0_15] : memref<8x128xf32, #tpu.memory_space<vmem>>, vector<8x128xf32>
    tpu.vector_store %arg5[%c0_14, %c0_15], %29 {strides = array<i32>} : memref<8x128xf32, #tpu.memory_space<vmem>>, vector<8x128xf32>,
    return
  }
  func.func @transform_0(%arg0: i32) -> (i32, i32) {
    %c0_i32 = arith.constant 0 : i32
    %c0_i32_0 = arith.constant 0 : i32
    %c0_i32_1 = arith.constant 0 : i32
    return %c0_i32, %c0_i32_0 : i32, i32
  }
  func.func @transform_1(%arg0: i32) -> (i32, i32) {
    %c0_i32 = arith.constant 0 : i32
    %c0_i32_0 = arith.constant 0 : i32
    return %c0_i32, %arg0 : i32, i32
  }
  func.func @transform_2(%arg0: i32) -> (i32, i32) {
    %c0_i32 = arith.constant 0 : i32
    %c0_i32_0 = arith.constant 0 : i32
    return %c0_i32, %arg0 : i32, i32
  }
  func.func @transform_3(%arg0: i32) -> (i32, i32) {
    %c0_i32 = arith.constant 0 : i32
    %c0_i32_0 = arith.constant 0 : i32
    return %c0_i32, %arg0 : i32, i32
  }
  func.func @transform_4(%arg0: i32) -> (i32, i32) {
    %c0_i32 = arith.constant 0 : i32
    %c0_i32_0 = arith.constant 0 : i32
    return %c0_i32, %arg0 : i32, i32
  }
}

</mosaic_0001>

<llo_original>
// kernel: tpu_custom_call.1
$region0: #{tpu_custom_call.1}
  #allocation0 [shape = 'u32[]', space=smem, size = 0x4, offset = 0x4, fixed_abs, tag = 'smem constant byte address 0x4 - core index']
  #allocation1 [shape = 'u32[72,128]{1,0:T(1,128)}', space=vmem, size = 0x9000, scoped, tag = 'internal scratch']
  %s0 = inlined_call_operand.hbm [shape: f32[8,32], index: 0, kind: input, shape index: {}]
  %s1 = inlined_call_operand.hbm [shape: f32[32,128], index: 1, kind: input, shape index: {}]
  %s2 = inlined_call_operand.vmem [shape: f32[1,128], index: 2, kind: input, shape index: {}]
  %s3 = inlined_call_operand.vmem [shape: f32[1,128], index: 3, kind: input, shape index: {}]
  %s4 = inlined_call_operand.hbm [shape: f32[8,128], index: 4, kind: output, shape index: {}]
  %s5 = sld [smem:[#allocation0]]
  $region34: #{tpu_custom_call.1} parent=0
    _
  %s7 = ssub.s32 1, %s5
  %s8 = scalar_select 0, %s7, %s5
  $region1: #{tpu_custom_call.1} parent=0
    #allocation2 [shape = 'u8[4096]{0}', space=vmem, size = 0x1000, scoped, tag = 'input window, operand 0, single buffered']
    #allocation3 [shape = 's32[1]{0}', space=sflag, size = 0x4, scoped, tag = 'scoped memory for tpu_custom_call.1']
    #allocation4 [shape = 's32[1]{0}', space=sflag, size = 0x4, scoped, tag = 'scoped memory for tpu_custom_call.1']
    #allocation5 [shape = 'u8[16384]{0}', space=vmem, size = 0x4000, scoped, tag = 'input window, operand 1, single buffered']
    #allocation6 [shape = 's32[1]{0}', space=sflag, size = 0x4, scoped, tag = 'scoped memory for tpu_custom_call.1']
    #allocation7 [shape = 'u8[4096]{0}', space=vmem, size = 0x1000, scoped, tag = 'output window, operand 0, single buffered']
    %9 = vsyncpa [#allocation3], 0
    %10 = vsyncpa [#allocation6], 0
    %11 = vsyncpa [#allocation4], 0
    // Predicated region
    $region2: #{tpu_custom_call.1} parent=1 // pred_check
      _
    $region3: #{tpu_custom_call.1} parent=1 // pred_check_branch
      %13 = sbr.rel (0) target = $region5
    $region4: #{tpu_custom_call.1} parent=1 // pred_region
      %15 = vsyncadd [#allocation3], 0
      %s17 = sshll.u32 %s0, 4
      %s18 = int_to_ptr.hbm [resolvable:$true] %s17
      %s19 = sshll.u32 [#allocation2], 4
      %s20 = int_to_ptr.vmem [resolvable:$true] %s19
      %22 = dma.hbm_to_vmem [thread:$0]  %s18, 128, %s20, [#allocation3]
    $region5: #{tpu_custom_call.1} parent=1 // pred_fallthru
      _
    // Predicated region
    $region6: #{tpu_custom_call.1} parent=1 // pred_check
      _
    $region7: #{tpu_custom_call.1} parent=1 // pred_check_branch
      %24 = sbr.rel (0) target = $region9
    $region8: #{tpu_custom_call.1} parent=1 // pred_region
      %26 = vsyncadd [#allocation6], 0
      %s27 = sshll.u32 %s1, 4
      %s28 = int_to_ptr.hbm [resolvable:$true] %s27
      %s29 = sshll.u32 [#allocation5], 4
      %s30 = int_to_ptr.vmem [resolvable:$true] %s29
      %35 = dma.hbm_to_vmem [thread:$0]  %s28, 512, %s30, [#allocation6], 128, 128, 8
    $region9: #{tpu_custom_call.1} parent=1 // pred_fallthru
      _
    // Predicated region
    $region10: #{tpu_custom_call.1} parent=1 // pred_check
      _
    $region11: #{tpu_custom_call.1} parent=1 // pred_check_branch
      %37 = sbr.rel (0) target = $region13
    $region12: #{tpu_custom_call.1} parent=1 // pred_region
      _
    $region13: #{tpu_custom_call.1} parent=1 // pred_fallthru
      _
    // Predicated region
    $region14: #{tpu_custom_call.1} parent=1 // pred_check
      _
    $region15: #{tpu_custom_call.1} parent=1 // pred_check_branch
      %39 = sbr.rel (0) target = $region17
    $region16: #{tpu_custom_call.1} parent=1 // pred_region
      _
    $region17: #{tpu_custom_call.1} parent=1 // pred_fallthru
      _
    // Predicated region
    $region18: #{tpu_custom_call.1} parent=1 // pred_check
      _
    $region19: #{tpu_custom_call.1} parent=1 // pred_check_branch
      %41 = sbr.rel (0) target = $region21
    $region20: #{tpu_custom_call.1} parent=1 // pred_region
      %43 = dma.done [#allocation3], 128
    $region21: #{tpu_custom_call.1} parent=1 // pred_fallthru
      _
    // Predicated region
    $region22: #{tpu_custom_call.1} parent=1 // pred_check
      _
    $region23: #{tpu_custom_call.1} parent=1 // pred_check_branch
      %45 = sbr.rel (0) target = $region25
    $region24: #{tpu_custom_call.1} parent=1 // pred_region
      %47 = dma.done [#allocation6], 512
    $region25: #{tpu_custom_call.1} parent=1 // pred_fallthru
      _
    %v48 = vld [vmem:[#allocation2] sm:$0xff]
    %v49 = vld [vmem:[#allocation5] sm:$0xff]
    %v50 = vld [vmem:[#allocation5 + $0x8] sm:$0xff]
    %v51 = vld [vmem:[#allocation5 + $0x10] sm:$0xff]
    %v52 = vld [vmem:[#allocation5 + $0x18] sm:$0xff]
    %vm53 = vcmask 261120
    %v55 = vsel %vm53, %v48, 0
    %57 = vmatpush.msra.mxu0 0.0
    %58 = vmatpush.msra.mxu0 0.0
    %59 = vmatpush.msra.mxu0 0.0
    %60 = vmatpush.msra.mxu0 0.0
    %61 = vmatpush.msra.mxu0 0.0
    %62 = vmatpush.msra.mxu0 0.0
    %63 = vmatpush.msra.mxu0 0.0
    %64 = vmatpush.msra.mxu0 0.0
    %65 = vmatpush.msra.mxu0 0.0
    %66 = vmatpush.msra.mxu0 0.0
    %67 = vmatpush.msra.mxu0 0.0
    %68 = vmatpush.msra.mxu0 0.0
    %69 = vmatpush.msra.mxu0 %v52
    %70 = vmatpush.msra.mxu0 %v51
    %71 = vmatpush.msra.mxu0 %v50
    %72 = vmatpush.msra.mxu0 %v49
    %73 = vmatmul.f32.gmra.mxu0 %v55
    %v74 = vpop.f32.mrf.mxu0
    %v75 = vadd.f32 0.0, %v74
    %76 = vdwg.mxu0
    %v77 = vrot.slane %v75, 4
    %v78 = vadd.f32 %v75, %v77
    %v79 = vrot.slane %v78, 2
    %v80 = vadd.f32 %v78, %v79
    %v81 = vrot.slane %v80, 1
    %v82 = vadd.f32 %v80, %v81
    %v83 = vmul.f32 %v75, %v75
    %v84 = vrot.slane %v83, 4
    %v85 = vadd.f32 %v83, %v84
    %v86 = vrot.slane %v85, 2
    %v87 = vadd.f32 %v85, %v86
    %v88 = vrot.slane %v87, 1
    %v89 = vadd.f32 %v87, %v88
    %v90 = vmul.f32 %v82, 0.125
    %v91 = vmul.f32 %v89, 0.125
    %v92 = vmul.f32 %v90, %v90
    %v93 = vsub.f32 %v91, %v92
    %v94 = vmax.f32 %v93, 0.0
    %v95 = vld [vmem:[%s2] sm:$0x1]
    %v96 = vadd.f32 %v94, 1e-05
    %v97 = vrsqrt.pop %v96
    %v98 = vmul.f32 %v97, %v96
    %v99 = vmul.f32 %v98, %v97
    %v100 = vmul.f32 0.5, %v99
    %v101 = vsub.f32 1.5, %v100
    %v102 = vmul.f32 %v97, %v101
    %vm103 = vweird.f32 %v96
    %vm104 = vweird.f32 %v97
    %vm105 = vmor %vm103, %vm104
    %v106 = vsel %vm105, %v97, %v102
    %v107 = vmul.f32 %v95, %v106
    %v108 = vld [vmem:[%s3] sm:$0x1]
    %v109 = vmul.f32 %v90, %v107
    %v110 = vsub.f32 %v108, %v109
    %v112 = vperm.slane %v107, 0
    %v114 = vmul.f32 %v75, %v112
    %v116 = vperm.slane %v110, 0
    %v118 = vadd.f32 %v114, %v116
    %v119 = vmax.f32 %v118, 0.0
    %120 = vst [vmem:[#allocation7] sm:$0xff] %v119
    // Predicated region
    $region26: #{tpu_custom_call.1} parent=1 // pred_check
      _
    $region27: #{tpu_custom_call.1} parent=1 // pred_check_branch
      %122 = sbr.rel (0) target = $region29
    $region28: #{tpu_custom_call.1} parent=1 // pred_region
      %124 = vsyncadd [#allocation4], 0
      %s126 = sshll.u32 [#allocation7], 4
      %s127 = int_to_ptr.vmem [resolvable:$true] %s126
      %s128 = sshll.u32 %s4, 4
      %s129 = int_to_ptr.hbm [resolvable:$true] %s128
      %131 = dma.vmem_to_hbm [thread:$0]  %s127, 128, %s129, [#allocation4]
    $region29: #{tpu_custom_call.1} parent=1 // pred_fallthru
      _
    // Predicated region
    $region30: #{tpu_custom_call.1} parent=1 // pred_check
      _
    $region31: #{tpu_custom_call.1} parent=1 // pred_check_branch
      %133 = sbr.rel (0) target = $region33
    $region32: #{tpu_custom_call.1} parent=1 // pred_region
      %135 = dma.done [#allocation4], 128
    $region33: #{tpu_custom_call.1} parent=1 // pred_fallthru
      _
    %136 = vsyncpa [#allocation3], 1
    %137 = vsyncpa [#allocation6], 1
    %138 = vsyncpa [#allocation4], 1

</llo_original>
